<compile_context>
chip_gen: v5e
topology: v5e:2x2
jax: 0.10.0
libtpu: 0.0.40
codegen_flags: <defaults>
</compile_context>

<pallas_src>
import functools

import jax
import jax.numpy as jnp
from jax.experimental import pallas as pl
from jax.experimental.pallas import tpu as pltpu

_LANE = 128
_SUBLANE = 8
# Combined (pred + tgt) bytes per grid step.  Double-buffered inputs are the
# only large VMEM consumers (kernel temporaries are strip-sized), so in-flight
# VMEM is ~2x this, well inside the limit below on all of v5e/v6e/v7x.
_STEP_BYTE_BUDGET = 16 * 1024 * 1024
_VMEM_LIMIT_BYTES = 48 * 1024 * 1024


def _round_up(x, m):
    return ((x + m - 1) // m) * m


def _largest_divisor_leq(n, cap):
    cap = max(1, min(n, int(cap)))
    for d in range(cap, 0, -1):
        if n % d == 0:
            return d
    return 1


def _metric_partials_kernel(pred_ref, tgt_ref, inter_ref, summ_ref, *,
                            num_classes, strip_rows):
    """One grid step over a (bB, C, tR, 128) tile of pred/tgt.

    Accumulates, per (batch-in-block b, class c), across grid axis 1:
      inter_ref[b, 0, c] += sum( (argmax_c(pred) == c) * tgt[c] )
      summ_ref [b, 0, c] += sum(  argmax_c(pred) == c ) + sum( tgt[c] )
    """
    j = pl.program_id(1)
    C = num_classes
    bB = pred_ref.shape[0]
    tile_rows = pred_ref.shape[2]
    n_strips = tile_rows // strip_rows

    @pl.when(j == 0)
    def _init():
        inter_ref[...] = jnp.zeros_like(inter_ref)
        summ_ref[...] = jnp.zeros_like(summ_ref)

    one = jnp.float32(1.0)
    zero = jnp.float32(0.0)
    acc_shape = (bB, strip_rows, _LANE)
    # 2*C vreg-resident per-class accumulators, carried across strips.
    init_carry = tuple(jnp.zeros(acc_shape, jnp.float32) for _ in range(2 * C))

    def strip_body(s, carry):
        inter_acc = list(carry[:C])
        summ_acc = list(carry[C:])
        r0 = pl.multiple_of(s * strip_rows, strip_rows)
        rows = pl.ds(r0, strip_rows)

        # Single-pass argmax over the class axis.  Strict '>' preserves the
        # first-occurrence tie-break of torch/jnp.argmax, and an all-zero
        # (padded) pixel argmaxes to class 0 -- the wrapper's padding
        # correction relies on this, do not change the tie-break.
        maxval = pred_ref[:, 0, rows, :].astype(jnp.float32)
        idx = jnp.zeros(acc_shape, jnp.int32)
        for c in range(1, C):
            v = pred_ref[:, c, rows, :].astype(jnp.float32)
            gt = v > maxval
            idx = jnp.where(gt, jnp.int32(c), idx)
            maxval = jnp.where(gt, v, maxval)

        for c in range(C):
            t_c = tgt_ref[:, c, rows, :].astype(jnp.float32)
            is_c = idx == c
            # intersection = sum(onehot * tgt): select instead of multiply.
            inter_acc[c] = inter_acc[c] + jnp.where(is_c, t_c, zero)
            # pred_sum + tgt_sum fused into one select + add.
            summ_acc[c] = summ_acc[c] + jnp.where(is_c, one + t_c, t_c)
        return tuple(inter_acc) + tuple(summ_acc)

    unroll = n_strips if n_strips <= 8 else 4
    carry = jax.lax.fori_loop(0, n_strips, strip_body, init_carry,
                              unroll=unroll)

    # One cross-lane/sublane (XLU) reduction per class per grid step.
    class_ids = jax.lax.broadcasted_iota(jnp.int32, (1, 1, C), 2)
    inter_partial = jnp.zeros((bB, 1, C), jnp.float32)
    summ_partial = jnp.zeros((bB, 1, C), jnp.float32)
    for c in range(C):
        i_c = jnp.sum(jnp.sum(carry[c], axis=2, keepdims=True),
                      axis=1, keepdims=True)                    # (bB, 1, 1)
        s_c = jnp.sum(jnp.sum(carry[C + c], axis=2, keepdims=True),
                      axis=1, keepdims=True)                    # (bB, 1, 1)
        sel = class_ids == c                                    # (1, 1, C)
        inter_partial = inter_partial + jnp.where(sel, i_c, zero)
        summ_partial = summ_partial + jnp.where(sel, s_c, zero)

    inter_ref[...] += inter_partial
    summ_ref[...] += summ_partial


def metric_pallas(predictions, targets, *, num_classes=3, smooth=1e-6,
                  use_dice=False):
    """predictions, targets: arrays of shape (B, C, H, W) (NCHW)."""
    B, C, H, W = predictions.shape
    assert C == num_classes, "channel dim must equal num_classes"
    assert targets.shape == predictions.shape

    pred_it = predictions.dtype.itemsize
    tgt_it = targets.dtype.itemsize
    # Row multiple respecting packed sublane tiling for sub-32-bit dtypes
    # (8 rows for 32-bit, 16 for bf16, 32 for int8).
    row_mult = _SUBLANE * max(1, 4 // pred_it, 4 // tgt_it)

    # ---- batch fold per step: kept small so the 2*C f32 strip accumulators
    # stay inside the 64-entry vreg file, and capped so the "parallel" batch
    # grid axis has >= 2 steps when B >= 2 (both v7x TensorCores busy).
    bB_cap = min(2, max(1, 32 // row_mult))
    if B >= 2:
        bB_cap = min(bB_cap, max(1, B // 2))
    bB = _largest_divisor_leq(B, bB_cap)

    # Strip rows: bB * strip_rows <= 32 -> accumulators <= ~24 vregs at C=3.
    strip_rows = max(row_mult, ((32 // bB) // row_mult) * row_mult)

    # ---- spatial tiling: pad R up to a multiple of strip_rows (never forces
    # degenerate 8-row tiles); split into ns near-equal tiles if the whole
    # padded image does not fit the per-step byte budget.
    S = H * W
    R = pl.cdiv(S, _LANE)
    bytes_per_row = C * _LANE * (pred_it + tgt_it)          # per batch element
    budget_rows = _STEP_BYTE_BUDGET // (bB * bytes_per_row)
    budget_rows = max(strip_rows, (budget_rows // strip_rows) * strip_rows)

    R_pad = _round_up(R, strip_rows)
    if R_pad <= budget_rows:
        tR, ns = R_pad, 1
    else:
        ns = pl.cdiv(R_pad, budget_rows)
        tR = _round_up(pl.cdiv(R_pad, ns), strip_rows)
        ns = pl.cdiv(R_pad, tR)
    R_pad = ns * tR
    S_pad = R_pad * _LANE
    nb = B // bB

    # ---- lane-dense, padded spatial layout: (B, C, H, W) -> (B, C, R_pad, 128)
    def _to_lane_dense(x):
        x = x.reshape(B, C, S)
        if S_pad != S:
            x = jnp.pad(x, ((0, 0), (0, 0), (0, S_pad - S)))
        return x.reshape(B, C, R_pad, _LANE)

    pred4 = _to_lane_dense(predictions)
    tgt4 = _to_lane_dense(targets)

    kernel = functools.partial(
        _metric_partials_kernel, num_classes=C, strip_rows=strip_rows)

    out_shape = (jax.ShapeDtypeStruct((nb, bB, 1, C), jnp.float32),
                 jax.ShapeDtypeStruct((nb, bB, 1, C), jnp.float32))

    grid_spec = pltpu.PrefetchScalarGridSpec(
        num_scalar_prefetch=0,
        grid=(nb, ns),
        in_specs=[
            pl.BlockSpec((bB, C, tR, _LANE), lambda i, j: (i, 0, j, 0)),
            pl.BlockSpec((bB, C, tR, _LANE), lambda i, j: (i, 0, j, 0)),
        ],
        out_specs=[
            pl.BlockSpec((None, bB, 1, C), lambda i, j: (i, 0, 0, 0)),
            pl.BlockSpec((None, bB, 1, C), lambda i, j: (i, 0, 0, 0)),
        ],
    )

    cost = pl.CostEstimate(
        flops=int(10 * B * C * S_pad),
        transcendentals=0,
        bytes_accessed=int(pred4.size * pred_it + tgt4.size * tgt_it
                           + 2 * B * C * 4),
    )

    inter_raw, summ_raw = pl.pallas_call(
        kernel,
        out_shape=out_shape,
        grid_spec=grid_spec,
        compiler_params=pltpu.CompilerParams(
            # batch axis parallel (2 TCs on v7x), spatial axis is the reduction
            dimension_semantics=("parallel", "arbitrary"),
            vmem_limit_bytes=_VMEM_LIMIT_BYTES,
        ),
        cost_estimate=cost,
    )(pred4, tgt4)

    # ---- tiny finalization in plain JAX.
    inter = inter_raw.reshape(B, C)
    summ = summ_raw.reshape(B, C)
    pad_count = S_pad - S
    if pad_count:
        # Padded pixels have all-zero predictions (argmax -> class 0 under the
        # kernel's strict-> tie-break) and zero targets: they inflate only the
        # class-0 predicted-onehot count, corrected here.
        summ = summ.at[:, 0].add(-float(pad_count))
    inter = inter + smooth
    summ = summ + smooth
    if use_dice:
        metric = 2.0 * inter / summ
    else:
        union = summ - inter + smooth
        metric = inter / union
    return jnp.mean(metric)


def _metric_reference(predictions, targets, num_classes=3, smooth=1e-6,
                      use_dice=False):
    """Pure-JAX reference mirroring the PyTorch module, for verification."""
    idx = jnp.argmax(predictions, axis=1)                        # (B, H, W)
    onehot = jax.nn.one_hot(idx, num_classes, axis=1,
                            dtype=jnp.float32)                   # (B, C, H, W)
    tgt = targets.astype(jnp.float32)
    inter = jnp.sum(onehot * tgt, axis=(2, 3)) + smooth
    summ = jnp.sum(onehot, axis=(2, 3)) + jnp.sum(tgt, axis=(2, 3)) + smooth
    if use_dice:
        metric = 2.0 * inter / summ
    else:
        union = summ - inter + smooth
        metric = inter / union
    return jnp.mean(metric)


if __name__ == "__main__":
    key = jax.random.PRNGKey(0)

    # Case 1: module defaults (IoU), small NCHW input.
    B, C, H, W = 2, 3, 16, 16
    k_pred, k_tgt, key = jax.random.split(key, 3)
    predictions = jax.random.normal(k_pred, (B, C, H, W), dtype=jnp.float32)
    tgt_labels = jax.random.randint(k_tgt, (B, H, W), 0, C)
    targets = jax.nn.one_hot(tgt_labels, C, axis=1, dtype=jnp.float32)

    result = metric_pallas(predictions, targets, num_classes=C,
                           smooth=1e-6, use_dice=False)
    result = jax.block_until_ready(result)
    ref = _metric_reference(predictions, targets, num_classes=C,
                            smooth=1e-6, use_dice=False)
    assert jnp.allclose(result, ref, rtol=1e-5, atol=1e-6), (result, ref)

    # Case 2: dice variant with non-multiple-of-128 spatial size
    # (exercises the zero-padding / class-0 summ correction path).
    B2, C2, H2, W2 = 2, 3, 17, 19
    k_pred2, k_tgt2, key = jax.random.split(key, 3)
    predictions2 = jax.random.normal(k_pred2, (B2, C2, H2, W2),
                                     dtype=jnp.float32)
    tgt_labels2 = jax.random.randint(k_tgt2, (B2, H2, W2), 0, C2)
    targets2 = jax.nn.one_hot(tgt_labels2, C2, axis=1, dtype=jnp.float32)

    result2 = jax.block_until_ready(
        metric_pallas(predictions2, targets2, num_classes=C2,
                      smooth=1e-6, use_dice=True))
    ref2 = _metric_reference(predictions2, targets2, num_classes=C2,
                             smooth=1e-6, use_dice=True)
    assert jnp.allclose(result2, ref2, rtol=1e-5, atol=1e-6), (result2, ref2)

    print("KERNEL_OK")
</pallas_src>

<mosaic_0001>
module attributes {stable_mosaic.version = 11 : i64} {
  func.func @_metric_partials_kernel(%arg0: i32, %arg1: i32, %arg2: memref<1x3x32x128xf32, #tpu.memory_space<vmem>>, %arg3: memref<1x3x32x128xf32, #tpu.memory_space<vmem>>, %arg4: memref<1x1x1x3xf32, #tpu.memory_space<vmem>>, %arg5: memref<1x1x1x3xf32, #tpu.memory_space<vmem>>) attributes {dimension_semantics = [#tpu.dimension_semantics<parallel>, #tpu.dimension_semantics<arbitrary>], iteration_bounds = array<i64: 2, 1>, scalar_prefetch = 0 : i64, scratch_operands = 0 : i64, tpu.core_type = #tpu.core_type<tc>, window_params = [{transform_indices = @transform_0, window_bounds = array<i64: 1, 3, 32, 128>}, {transform_indices = @transform_1, window_bounds = array<i64: 1, 3, 32, 128>}, {transform_indices = @transform_2, window_bounds = array<i64: 1, 1, 1, 3>}, {transform_indices = @transform_3, window_bounds = array<i64: 1, 1, 1, 3>}]} {
    %c0_i32 = arith.constant 0 : i32
    %0 = arith.cmpi eq, %arg1, %c0_i32 : i32
    %1 = arith.extui %0 : i1 to i32
    %c0_i32_0 = arith.constant 0 : i32
    %2 = arith.cmpi ne, %1, %c0_i32_0 : i32
    scf.if %2 {
      %cst_68 = arith.constant 0.000000e+00 : f32
      %139 = vector.broadcast %cst_68 : f32 to vector<1x1x3xf32>
      %c0_69 = arith.constant 0 : index
      %c0_70 = arith.constant 0 : index
      %c0_71 = arith.constant 0 : index
      %c0_72 = arith.constant 0 : index
      %140 = vector.load %arg4[%c0_69, %c0_70, %c0_71, %c0_72] : memref<1x1x1x3xf32, #tpu.memory_space<vmem>>, vector<1x1x1x3xf32>
      %141 = vector.shape_cast %140 : vector<1x1x1x3xf32> to vector<1x1x3xf32>
      %142 = vector.shape_cast %139 : vector<1x1x3xf32> to vector<1x1x1x3xf32>
      tpu.vector_store %arg4[%c0_69, %c0_70, %c0_71, %c0_72], %142 {strides = array<i32>} : memref<1x1x1x3xf32, #tpu.memory_space<vmem>>, vector<1x1x1x3xf32>,
      %cst_73 = arith.constant 0.000000e+00 : f32
      %143 = vector.broadcast %cst_73 : f32 to vector<1x1x3xf32>
      %c0_74 = arith.constant 0 : index
      %c0_75 = arith.constant 0 : index
      %c0_76 = arith.constant 0 : index
      %c0_77 = arith.constant 0 : index
      %144 = vector.load %arg5[%c0_74, %c0_75, %c0_76, %c0_77] : memref<1x1x1x3xf32, #tpu.memory_space<vmem>>, vector<1x1x1x3xf32>
      %145 = vector.shape_cast %144 : vector<1x1x1x3xf32> to vector<1x1x3xf32>
      %146 = vector.shape_cast %143 : vector<1x1x3xf32> to vector<1x1x1x3xf32>
      tpu.vector_store %arg5[%c0_74, %c0_75, %c0_76, %c0_77], %146 {strides = array<i32>} : memref<1x1x1x3xf32, #tpu.memory_space<vmem>>, vector<1x1x1x3xf32>,
    } else {
    }
    %cst = arith.constant 0.000000e+00 : f32
    %3 = vector.broadcast %cst : f32 to vector<1x32x128xf32>
    %cst_1 = arith.constant 0.000000e+00 : f32
    %4 = vector.broadcast %cst_1 : f32 to vector<1x32x128xf32>
    %cst_2 = arith.constant 0.000000e+00 : f32
    %5 = vector.broadcast %cst_2 : f32 to vector<1x32x128xf32>
    %cst_3 = arith.constant 0.000000e+00 : f32
    %6 = vector.broadcast %cst_3 : f32 to vector<1x32x128xf32>
    %cst_4 = arith.constant 0.000000e+00 : f32
    %7 = vector.broadcast %cst_4 : f32 to vector<1x32x128xf32>
    %cst_5 = arith.constant 0.000000e+00 : f32
    %8 = vector.broadcast %cst_5 : f32 to vector<1x32x128xf32>
    %cst_6 = arith.constant 0.000000e+00 : f32
    %cst_7 = arith.constant 1.000000e+00 : f32
    %c0_i32_8 = arith.constant 0 : i32
    %c32_i32 = arith.constant 32 : i32
    %9 = arith.muli %c0_i32_8, %c32_i32 : i32
    %10 = tpu.assume_multiple %9, 32 : i32
    %c0 = arith.constant 0 : index
    %c0_9 = arith.constant 0 : index
    %11 = arith.index_cast %10 : i32 to index
    %c0_10 = arith.constant 0 : index
    %12 = vector.load %arg2[%c0, %c0_9, %11, %c0_10] : memref<1x3x32x128xf32, #tpu.memory_space<vmem>>, vector<1x1x32x128xf32>
    %13 = vector.shape_cast %12 : vector<1x1x32x128xf32> to vector<1x32x128xf32>
    %c0_i32_11 = arith.constant 0 : i32
    %14 = vector.broadcast %c0_i32_11 : i32 to vector<1x32x128xi32>
    %c0_12 = arith.constant 0 : index
    %c1 = arith.constant 1 : index
    %15 = arith.index_cast %10 : i32 to index
    %c0_13 = arith.constant 0 : index
    %16 = vector.load %arg2[%c0_12, %c1, %15, %c0_13] : memref<1x3x32x128xf32, #tpu.memory_space<vmem>>, vector<1x1x32x128xf32>
    %17 = vector.shape_cast %16 : vector<1x1x32x128xf32> to vector<1x32x128xf32>
    %18 = arith.cmpf ogt, %17, %13 : vector<1x32x128xf32>
    %c1_i32 = arith.constant 1 : i32
    %19 = vector.broadcast %c1_i32 : i32 to vector<1x32x128xi32>
    %20 = arith.select %18, %19, %14 : vector<1x32x128xi1>, vector<1x32x128xi32>
    %21 = arith.select %18, %17, %13 : vector<1x32x128xi1>, vector<1x32x128xf32>
    %c0_14 = arith.constant 0 : index
    %c2 = arith.constant 2 : index
    %22 = arith.index_cast %10 : i32 to index
    %c0_15 = arith.constant 0 : index
    %23 = vector.load %arg2[%c0_14, %c2, %22, %c0_15] : memref<1x3x32x128xf32, #tpu.memory_space<vmem>>, vector<1x1x32x128xf32>
    %24 = vector.shape_cast %23 : vector<1x1x32x128xf32> to vector<1x32x128xf32>
    %25 = arith.cmpf ogt, %24, %21 : vector<1x32x128xf32>
    %c2_i32 = arith.constant 2 : i32
    %26 = vector.broadcast %c2_i32 : i32 to vector<1x32x128xi32>
    %27 = arith.select %25, %26, %20 : vector<1x32x128xi1>, vector<1x32x128xi32>
    %c0_16 = arith.constant 0 : index
    %c0_17 = arith.constant 0 : index
    %28 = arith.index_cast %10 : i32 to index
    %c0_18 = arith.constant 0 : index
    %29 = vector.load %arg3[%c0_16, %c0_17, %28, %c0_18] : memref<1x3x32x128xf32, #tpu.memory_space<vmem>>, vector<1x1x32x128xf32>
    %30 = vector.shape_cast %29 : vector<1x1x32x128xf32> to vector<1x32x128xf32>
    %c0_i32_19 = arith.constant 0 : i32
    %31 = vector.broadcast %c0_i32_19 : i32 to vector<1x32x128xi32>
    %32 = arith.cmpi eq, %27, %31 : vector<1x32x128xi32>
    %33 = vector.broadcast %cst_6 : f32 to vector<1x32x128xf32>
    %34 = arith.select %32, %30, %33 : vector<1x32x128xi1>, vector<1x32x128xf32>
    %35 = arith.addf %3, %34 : vector<1x32x128xf32>
    %36 = vector.broadcast %cst_7 : f32 to vector<1x32x128xf32>
    %37 = arith.addf %36, %30 : vector<1x32x128xf32>
    %38 = arith.select %32, %37, %30 : vector<1x32x128xi1>, vector<1x32x128xf32>
    %39 = arith.addf %6, %38 : vector<1x32x128xf32>
    %c0_20 = arith.constant 0 : index
    %c1_21 = arith.constant 1 : index
    %40 = arith.index_cast %10 : i32 to index
    %c0_22 = arith.constant 0 : index
    %41 = vector.load %arg3[%c0_20, %c1_21, %40, %c0_22] : memref<1x3x32x128xf32, #tpu.memory_space<vmem>>, vector<1x1x32x128xf32>
    %42 = vector.shape_cast %41 : vector<1x1x32x128xf32> to vector<1x32x128xf32>
    %c1_i32_23 = arith.constant 1 : i32
    %43 = vector.broadcast %c1_i32_23 : i32 to vector<1x32x128xi32>
    %44 = arith.cmpi eq, %27, %43 : vector<1x32x128xi32>
    %45 = vector.broadcast %cst_6 : f32 to vector<1x32x128xf32>
    %46 = arith.select %44, %42, %45 : vector<1x32x128xi1>, vector<1x32x128xf32>
    %47 = arith.addf %4, %46 : vector<1x32x128xf32>
    %48 = vector.broadcast %cst_7 : f32 to vector<1x32x128xf32>
    %49 = arith.addf %48, %42 : vector<1x32x128xf32>
    %50 = arith.select %44, %49, %42 : vector<1x32x128xi1>, vector<1x32x128xf32>
    %51 = arith.addf %7, %50 : vector<1x32x128xf32>
    %c0_24 = arith.constant 0 : index
    %c2_25 = arith.constant 2 : index
    %52 = arith.index_cast %10 : i32 to index
    %c0_26 = arith.constant 0 : index
    %53 = vector.load %arg3[%c0_24, %c2_25, %52, %c0_26] : memref<1x3x32x128xf32, #tpu.memory_space<vmem>>, vector<1x1x32x128xf32>
    %54 = vector.shape_cast %53 : vector<1x1x32x128xf32> to vector<1x32x128xf32>
    %c2_i32_27 = arith.constant 2 : i32
    %55 = vector.broadcast %c2_i32_27 : i32 to vector<1x32x128xi32>
    %56 = arith.cmpi eq, %27, %55 : vector<1x32x128xi32>
    %57 = vector.broadcast %cst_6 : f32 to vector<1x32x128xf32>
    %58 = arith.select %56, %54, %57 : vector<1x32x128xi1>, vector<1x32x128xf32>
    %59 = arith.addf %5, %58 : vector<1x32x128xf32>
    %60 = vector.broadcast %cst_7 : f32 to vector<1x32x128xf32>
    %61 = arith.addf %60, %54 : vector<1x32x128xf32>
    %62 = arith.select %56, %61, %54 : vector<1x32x128xi1>, vector<1x32x128xf32>
    %63 = arith.addf %8, %62 : vector<1x32x128xf32>
    %c1_i32_28 = arith.constant 1 : i32
    %64 = tpu.iota {dimensions = array<i32: 2>} : vector<1x1x3xi32>
    %cst_29 = arith.constant 0.000000e+00 : f32
    %65 = vector.broadcast %cst_29 : f32 to vector<1x1x3xf32>
    %cst_30 = arith.constant 0.000000e+00 : f32
    %66 = vector.broadcast %cst_30 : f32 to vector<1x1x3xf32>
    %cst_31 = arith.constant dense<0.000000e+00> : vector<1x32xf32>
    %67 = vector.multi_reduction <add>, %35, %cst_31 [2] : vector<1x32x128xf32> to vector<1x32xf32>
    %68 = vector.shape_cast %67 : vector<1x32xf32> to vector<1x32x1xf32>
    %cst_32 = arith.constant dense<0.000000e+00> : vector<1x1xf32>
    %69 = vector.multi_reduction <add>, %68, %cst_32 [1] : vector<1x32x1xf32> to vector<1x1xf32>
    %70 = vector.shape_cast %69 : vector<1x1xf32> to vector<1x1x1xf32>
    %cst_33 = arith.constant dense<0.000000e+00> : vector<1x32xf32>
    %71 = vector.multi_reduction <add>, %39, %cst_33 [2] : vector<1x32x128xf32> to vector<1x32xf32>
    %72 = vector.shape_cast %71 : vector<1x32xf32> to vector<1x32x1xf32>
    %cst_34 = arith.constant dense<0.000000e+00> : vector<1x1xf32>
    %73 = vector.multi_reduction <add>, %72, %cst_34 [1] : vector<1x32x1xf32> to vector<1x1xf32>
    %74 = vector.shape_cast %73 : vector<1x1xf32> to vector<1x1x1xf32>
    %c0_i32_35 = arith.constant 0 : i32
    %75 = vector.broadcast %c0_i32_35 : i32 to vector<1x1x3xi32>
    %76 = arith.cmpi eq, %64, %75 : vector<1x1x3xi32>
    %cst_36 = arith.constant 0.000000e+00 : f32
    %77 = vector.shape_cast %70 : vector<1x1x1xf32> to vector<1x1x1xf32>
    %78 = vector.broadcast %77 : vector<1x1x1xf32> to vector<1x1x3xf32>
    %79 = vector.broadcast %cst_36 : f32 to vector<1x1x3xf32>
    %80 = arith.select %76, %78, %79 : vector<1x1x3xi1>, vector<1x1x3xf32>
    %81 = arith.addf %65, %80 : vector<1x1x3xf32>
    %cst_37 = arith.constant 0.000000e+00 : f32
    %82 = vector.shape_cast %74 : vector<1x1x1xf32> to vector<1x1x1xf32>
    %83 = vector.broadcast %82 : vector<1x1x1xf32> to vector<1x1x3xf32>
    %84 = vector.broadcast %cst_37 : f32 to vector<1x1x3xf32>
    %85 = arith.select %76, %83, %84 : vector<1x1x3xi1>, vector<1x1x3xf32>
    %86 = arith.addf %66, %85 : vector<1x1x3xf32>
    %cst_38 = arith.constant dense<0.000000e+00> : vector<1x32xf32>
    %87 = vector.multi_reduction <add>, %47, %cst_38 [2] : vector<1x32x128xf32> to vector<1x32xf32>
    %88 = vector.shape_cast %87 : vector<1x32xf32> to vector<1x32x1xf32>
    %cst_39 = arith.constant dense<0.000000e+00> : vector<1x1xf32>
    %89 = vector.multi_reduction <add>, %88, %cst_39 [1] : vector<1x32x1xf32> to vector<1x1xf32>
    %90 = vector.shape_cast %89 : vector<1x1xf32> to vector<1x1x1xf32>
    %cst_40 = arith.constant dense<0.000000e+00> : vector<1x32xf32>
    %91 = vector.multi_reduction <add>, %51, %cst_40 [2] : vector<1x32x128xf32> to vector<1x32xf32>
    %92 = vector.shape_cast %91 : vector<1x32xf32> to vector<1x32x1xf32>
    %cst_41 = arith.constant dense<0.000000e+00> : vector<1x1xf32>
    %93 = vector.multi_reduction <add>, %92, %cst_41 [1] : vector<1x32x1xf32> to vector<1x1xf32>
    %94 = vector.shape_cast %93 : vector<1x1xf32> to vector<1x1x1xf32>
    %c1_i32_42 = arith.constant 1 : i32
    %95 = vector.broadcast %c1_i32_42 : i32 to vector<1x1x3xi32>
    %96 = arith.cmpi eq, %64, %95 : vector<1x1x3xi32>
    %cst_43 = arith.constant 0.000000e+00 : f32
    %97 = vector.shape_cast %90 : vector<1x1x1xf32> to vector<1x1x1xf32>
    %98 = vector.broadcast %97 : vector<1x1x1xf32> to vector<1x1x3xf32>
    %99 = vector.broadcast %cst_43 : f32 to vector<1x1x3xf32>
    %100 = arith.select %96, %98, %99 : vector<1x1x3xi1>, vector<1x1x3xf32>
    %101 = arith.addf %81, %100 : vector<1x1x3xf32>
    %cst_44 = arith.constant 0.000000e+00 : f32
    %102 = vector.shape_cast %94 : vector<1x1x1xf32> to vector<1x1x1xf32>
    %103 = vector.broadcast %102 : vector<1x1x1xf32> to vector<1x1x3xf32>
    %104 = vector.broadcast %cst_44 : f32 to vector<1x1x3xf32>
    %105 = arith.select %96, %103, %104 : vector<1x1x3xi1>, vector<1x1x3xf32>
    %106 = arith.addf %86, %105 : vector<1x1x3xf32>
    %cst_45 = arith.constant dense<0.000000e+00> : vector<1x32xf32>
    %107 = vector.multi_reduction <add>, %59, %cst_45 [2] : vector<1x32x128xf32> to vector<1x32xf32>
    %108 = vector.shape_cast %107 : vector<1x32xf32> to vector<1x32x1xf32>
    %cst_46 = arith.constant dense<0.000000e+00> : vector<1x1xf32>
    %109 = vector.multi_reduction <add>, %108, %cst_46 [1] : vector<1x32x1xf32> to vector<1x1xf32>
    %110 = vector.shape_cast %109 : vector<1x1xf32> to vector<1x1x1xf32>
    %cst_47 = arith.constant dense<0.000000e+00> : vector<1x32xf32>
    %111 = vector.multi_reduction <add>, %63, %cst_47 [2] : vector<1x32x128xf32> to vector<1x32xf32>
    %112 = vector.shape_cast %111 : vector<1x32xf32> to vector<1x32x1xf32>
    %cst_48 = arith.constant dense<0.000000e+00> : vector<1x1xf32>
    %113 = vector.multi_reduction <add>, %112, %cst_48 [1] : vector<1x32x1xf32> to vector<1x1xf32>
    %114 = vector.shape_cast %113 : vector<1x1xf32> to vector<1x1x1xf32>
    %c2_i32_49 = arith.constant 2 : i32
    %115 = vector.broadcast %c2_i32_49 : i32 to vector<1x1x3xi32>
    %116 = arith.cmpi eq, %64, %115 : vector<1x1x3xi32>
    %cst_50 = arith.constant 0.000000e+00 : f32
    %117 = vector.shape_cast %110 : vector<1x1x1xf32> to vector<1x1x1xf32>
    %118 = vector.broadcast %117 : vector<1x1x1xf32> to vector<1x1x3xf32>
    %119 = vector.broadcast %cst_50 : f32 to vector<1x1x3xf32>
    %120 = arith.select %116, %118, %119 : vector<1x1x3xi1>, vector<1x1x3xf32>
    %121 = arith.addf %101, %120 : vector<1x1x3xf32>
    %cst_51 = arith.constant 0.000000e+00 : f32
    %122 = vector.shape_cast %114 : vector<1x1x1xf32> to vector<1x1x1xf32>
    %123 = vector.broadcast %122 : vector<1x1x1xf32> to vector<1x1x3xf32>
    %124 = vector.broadcast %cst_51 : f32 to vector<1x1x3xf32>
    %125 = arith.select %116, %123, %124 : vector<1x1x3xi1>, vector<1x1x3xf32>
    %126 = arith.addf %106, %125 : vector<1x1x3xf32>
    %c0_52 = arith.constant 0 : index
    %c0_53 = arith.constant 0 : index
    %c0_54 = arith.constant 0 : index
    %c0_55 = arith.constant 0 : index
    %127 = vector.load %arg4[%c0_52, %c0_53, %c0_54, %c0_55] : memref<1x1x1x3xf32, #tpu.memory_space<vmem>>, vector<1x1x1x3xf32>
    %128 = vector.shape_cast %127 : vector<1x1x1x3xf32> to vector<1x1x3xf32>
    %129 = arith.addf %128, %121 : vector<1x1x3xf32>
    %c0_56 = arith.constant 0 : index
    %c0_57 = arith.constant 0 : index
    %c0_58 = arith.constant 0 : index
    %c0_59 = arith.constant 0 : index
    %130 = vector.load %arg4[%c0_56, %c0_57, %c0_58, %c0_59] : memref<1x1x1x3xf32, #tpu.memory_space<vmem>>, vector<1x1x1x3xf32>
    %131 = vector.shape_cast %130 : vector<1x1x1x3xf32> to vector<1x1x3xf32>
    %132 = vector.shape_cast %129 : vector<1x1x3xf32> to vector<1x1x1x3xf32>
    tpu.vector_store %arg4[%c0_56, %c0_57, %c0_58, %c0_59], %132 {strides = array<i32>} : memref<1x1x1x3xf32, #tpu.memory_space<vmem>>, vector<1x1x1x3xf32>,
    %c0_60 = arith.constant 0 : index
    %c0_61 = arith.constant 0 : index
    %c0_62 = arith.constant 0 : index
    %c0_63 = arith.constant 0 : index
    %133 = vector.load %arg5[%c0_60, %c0_61, %c0_62, %c0_63] : memref<1x1x1x3xf32, #tpu.memory_space<vmem>>, vector<1x1x1x3xf32>
    %134 = vector.shape_cast %133 : vector<1x1x1x3xf32> to vector<1x1x3xf32>
    %135 = arith.addf %134, %126 : vector<1x1x3xf32>
    %c0_64 = arith.constant 0 : index
    %c0_65 = arith.constant 0 : index
    %c0_66 = arith.constant 0 : index
    %c0_67 = arith.constant 0 : index
    %136 = vector.load %arg5[%c0_64, %c0_65, %c0_66, %c0_67] : memref<1x1x1x3xf32, #tpu.memory_space<vmem>>, vector<1x1x1x3xf32>
    %137 = vector.shape_cast %136 : vector<1x1x1x3xf32> to vector<1x1x3xf32>
    %138 = vector.shape_cast %135 : vector<1x1x3xf32> to vector<1x1x1x3xf32>
    tpu.vector_store %arg5[%c0_64, %c0_65, %c0_66, %c0_67], %138 {strides = array<i32>} : memref<1x1x1x3xf32, #tpu.memory_space<vmem>>, vector<1x1x1x3xf32>,
    return
  }
  func.func @transform_0(%arg0: i32, %arg1: i32) -> (i32, i32, i32, i32) {
    %c0_i32 = arith.constant 0 : i32
    %c0_i32_0 = arith.constant 0 : i32
    %c0_i32_1 = arith.constant 0 : i32
    return %arg0, %c0_i32, %arg1, %c0_i32_0 : i32, i32, i32, i32
  }
  func.func @transform_1(%arg0: i32, %arg1: i32) -> (i32, i32, i32, i32) {
    %c0_i32 = arith.constant 0 : i32
    %c0_i32_0 = arith.constant 0 : i32
    %c0_i32_1 = arith.constant 0 : i32
    return %arg0, %c0_i32, %arg1, %c0_i32_0 : i32, i32, i32, i32
  }
  func.func @transform_2(%arg0: i32, %arg1: i32) -> (i32, i32, i32, i32) {
    %c0_i32 = arith.constant 0 : i32
    %c0_i32_0 = arith.constant 0 : i32
    %c0_i32_1 = arith.constant 0 : i32
    %c0_i32_2 = arith.constant 0 : i32
    return %arg0, %c0_i32, %c0_i32_0, %c0_i32_1 : i32, i32, i32, i32
  }
  func.func @transform_3(%arg0: i32, %arg1: i32) -> (i32, i32, i32, i32) {
    %c0_i32 = arith.constant 0 : i32
    %c0_i32_0 = arith.constant 0 : i32
    %c0_i32_1 = arith.constant 0 : i32
    %c0_i32_2 = arith.constant 0 : i32
    return %arg0, %c0_i32, %c0_i32_0, %c0_i32_1 : i32, i32, i32, i32
  }
}

</mosaic_0001>

<llo_original>
// kernel: tpu_custom_call.1
$region0: #{tpu_custom_call.1}
  #allocation0 [shape = 'u32[]', space=smem, size = 0x4, offset = 0x4, fixed_abs, tag = 'smem constant byte address 0x4 - core index']
  #allocation1 [shape = 'u32[72,128]{1,0:T(1,128)}', space=vmem, size = 0x9000, scoped, tag = 'internal scratch']
  %s0 = inlined_call_operand.hbm [shape: f32[2,3,32,128], index: 0, kind: input, shape index: {}]
  %s1 = inlined_call_operand.hbm [shape: f32[2,3,32,128], index: 1, kind: input, shape index: {}]
  %s2 = inlined_call_operand.hbm [shape: f32[2,1,1,3], index: 2, kind: output, shape index: {0}]
  %s3 = inlined_call_operand.hbm [shape: f32[2,1,1,3], index: 3, kind: output, shape index: {1}]
  %4 = xla_tuple %s2, %s3
  %s5 = sld [smem:[#allocation0]]
  $region61: #{tpu_custom_call.1} parent=0
    _
  %s7 = ssub.s32 1, %s5
  %s8 = scalar_select 0, %s7, %s5
  $region1: #{tpu_custom_call.1} parent=0
    #allocation2 [shape = 'u8[98304]{0}', space=vmem, size = 0x18000, scoped, tag = 'input window, operand 0']
    #allocation3 [shape = 's32[2]{0}', space=sflag, size = 0x8, scoped, tag = 'scoped memory for tpu_custom_call.1']
    #allocation4 [shape = 's32[2]{0}', space=sflag, size = 0x8, scoped, tag = 'scoped memory for tpu_custom_call.1']
    #allocation5 [shape = 'u8[98304]{0}', space=vmem, size = 0x18000, scoped, tag = 'input window, operand 1']
    #allocation6 [shape = 's32[2]{0}', space=sflag, size = 0x8, scoped, tag = 'scoped memory for tpu_custom_call.1']
    #allocation7 [shape = 'u8[1024]{0}', space=vmem, size = 0x400, scoped, tag = 'output window, operand 0']
    #allocation8 [shape = 'u8[1024]{0}', space=vmem, size = 0x400, scoped, tag = 'output window, operand 1']
    #allocation9 [shape = 's32[2]{0}', space=sflag, size = 0x8, scoped, tag = 'scoped memory for tpu_custom_call.1']
    %9 = vsyncpa [#allocation3], 0
    %s10 = scalar_lea.sflag [#allocation3], 1
    %11 = vsyncpa %s10, 0
    %12 = vsyncpa [#allocation6], 0
    %s13 = scalar_lea.sflag [#allocation6], 1
    %14 = vsyncpa %s13, 0
    %15 = vsyncpa [#allocation4], 0
    %s16 = scalar_lea.sflag [#allocation4], 1
    %17 = vsyncpa %s16, 0
    %18 = vsyncpa [#allocation9], 0
    %s19 = scalar_lea.sflag [#allocation9], 1
    %20 = vsyncpa %s19, 0
    loop: start=0, step=1, limit=4
    $region2: #{tpu_custom_call.1} parent=1 // loop_pre_header
      _
    $region3: #{tpu_custom_call.1} parent=1 // loop_header
      %s22 = sphi 0, %s26
      %p23 = scmp.ge.s32.totalorder %s22, 4
      %s29 = sphi 0, %s41
      %s30 = sphi 0, %s37
      %s31 = sphi 0, %s29
      %s32 = sphi 0, %s30
      %s33 = sphi 0, %s31
      %s34 = sphi 0, %s32
      %s46 = sphi 0, %s48
      %s49 = sphi 0, %s46
      %s50 = sphi 0, %s49
      %s66 = sphi 0, %s50
      %s74 = sphi 0, %s76
      %s77 = sphi 0, %s74
      %s78 = sphi 0, %s77
      %s94 = sphi 0, %s78
      %s100 = sphi 0, %s102
      %s103 = sphi 0, %s100
      %s104 = sphi 0, %s103
      %s120 = sphi 0, %s104
      %s126 = sphi 0, %s128
      %s129 = sphi 0, %s126
      %s130 = sphi 0, %s129
      %s146 = sphi 0, %s130
    $region4: #{tpu_custom_call.1} parent=1 // loop_header_branch
      %25 = sbr.rel (%p23) target = $region8
    $region5: #{tpu_custom_call.1} parent=1 // loop_body
      %s27 = ssub.s32 %s22, 1
      %s28 = ssub.s32 %s22, 2
      %s35 = sadd.s32 1, %s30
      %p36 = scmp.ge.s32.totalorder %s35, 1
      %s37 = scalar_select %p36, 0, %s35
      %s38 = sadd.s32 1, %s29
      %s39 = scalar_select %p36, %s38, %s29
      %p40 = scmp.ge.s32.totalorder %s39, 2
      %s41 = scalar_select %p40, 0, %s39
      %s42 = ssub.s32 %s29, %s41
      %s43 = ssub.s32 %s30, %s37
      %s44 = sor.u32 %s42, %s43
      %p45 = scmp.eq.s32.totalorder %s44, 0
      %s47 = sadd.s32 %s46, 1
      %s48 = scalar_select %p45, %s46, %s47
      %p51 = pneg %p45
      %p52 = scmp.eq.s32.totalorder %s22, 1
      %p53 = por %p51, %p52
      %p54 = scmp.ne.s32.totalorder %s46, %s49
      %p55 = scmp.eq.s32.totalorder %s22, 0
      %p56 = por %p54, %p55
      %p57 = scmp.ne.s32.totalorder %s46, %s49
      %p58 = scmp.eq.s32.totalorder %s27, 1
      %p59 = por %p57, %p58
      %p60 = scmp.ne.s32.totalorder %s49, %s50
      %p61 = scmp.eq.s32.totalorder %s27, 0
      %p62 = por %p60, %p61
      %p63 = scmp.ne.s32.totalorder %s49, %s50
      %p64 = scmp.eq.s32.totalorder %s28, 1
      %p65 = por %p63, %p64
      %p67 = scmp.ne.s32.totalorder %s50, %s66
      %p68 = scmp.eq.s32.totalorder %s28, 0
      %p69 = por %p67, %p68
      %s70 = ssub.s32 %s29, %s41
      %s71 = ssub.s32 %s30, %s37
      %s72 = sor.u32 %s70, %s71
      %p73 = scmp.eq.s32.totalorder %s72, 0
      %s75 = sadd.s32 %s74, 1
      %s76 = scalar_select %p73, %s74, %s75
      %p79 = pneg %p73
      %p80 = scmp.eq.s32.totalorder %s22, 1
      %p81 = por %p79, %p80
      %p82 = scmp.ne.s32.totalorder %s74, %s77
      %p83 = scmp.eq.s32.totalorder %s22, 0
      %p84 = por %p82, %p83
      %p85 = scmp.ne.s32.totalorder %s74, %s77
      %p86 = scmp.eq.s32.totalorder %s27, 1
      %p87 = por %p85, %p86
      %p88 = scmp.ne.s32.totalorder %s77, %s78
      %p89 = scmp.eq.s32.totalorder %s27, 0
      %p90 = por %p88, %p89
      %p91 = scmp.ne.s32.totalorder %s77, %s78
      %p92 = scmp.eq.s32.totalorder %s28, 1
      %p93 = por %p91, %p92
      %p95 = scmp.ne.s32.totalorder %s78, %s94
      %p96 = scmp.eq.s32.totalorder %s28, 0
      %p97 = por %p95, %p96
      %s98 = ssub.s32 %s29, %s41
      %p99 = scmp.eq.s32.totalorder %s98, 0
      %s101 = sadd.s32 %s100, 1
      %s102 = scalar_select %p99, %s100, %s101
      %p105 = pneg %p99
      %p106 = scmp.eq.s32.totalorder %s22, 1
      %p107 = por %p105, %p106
      %p108 = scmp.ne.s32.totalorder %s100, %s103
      %p109 = scmp.eq.s32.totalorder %s22, 0
      %p110 = por %p108, %p109
      %p111 = scmp.ne.s32.totalorder %s100, %s103
      %p112 = scmp.eq.s32.totalorder %s27, 1
      %p113 = por %p111, %p112
      %p114 = scmp.ne.s32.totalorder %s103, %s104
      %p115 = scmp.eq.s32.totalorder %s27, 0
      %p116 = por %p114, %p115
      %p117 = scmp.ne.s32.totalorder %s103, %s104
      %p118 = scmp.eq.s32.totalorder %s28, 1
      %p119 = por %p117, %p118
      %p121 = scmp.ne.s32.totalorder %s104, %s120
      %p122 = scmp.eq.s32.totalorder %s28, 0
      %p123 = por %p121, %p122
      %s124 = ssub.s32 %s29, %s41
      %p125 = scmp.eq.s32.totalorder %s124, 0
      %s127 = sadd.s32 %s126, 1
      %s128 = scalar_select %p125, %s126, %s127
      %p131 = pneg %p125
      %p132 = scmp.eq.s32.totalorder %s22, 1
      %p133 = por %p131, %p132
      %p134 = scmp.ne.s32.totalorder %s126, %s129
      %p135 = scmp.eq.s32.totalorder %s22, 0
      %p136 = por %p134, %p135
      %p137 = scmp.ne.s32.totalorder %s126, %s129
      %p138 = scmp.eq.s32.totalorder %s27, 1
      %p139 = por %p137, %p138
      %p140 = scmp.ne.s32.totalorder %s129, %s130
      %p141 = scmp.eq.s32.totalorder %s27, 0
      %p142 = por %p140, %p141
      %p143 = scmp.ne.s32.totalorder %s129, %s130
      %p144 = scmp.eq.s32.totalorder %s28, 1
      %p145 = por %p143, %p144
      %p147 = scmp.ne.s32.totalorder %s130, %s146
      %p148 = scmp.eq.s32.totalorder %s28, 0
      %p149 = por %p147, %p148
      %p150 = scmp.le.s32.totalorder 1, %s22
      %p151 = scmp.lt.s32.totalorder %s22, 3
      %p152 = pnand %p150, %p151
      %p153 = pneg %p152
      // Predicated region
      $region9: #{tpu_custom_call.1} parent=5 // pred_check
        _
      $region10: #{tpu_custom_call.1} parent=5 // pred_check_branch
        %155 = sbr.rel (%p152) target = $region12
      $region11: #{tpu_custom_call.1} parent=5 // pred_region
        %s156 = ssub.s32 %s22, 1
      $region12: #{tpu_custom_call.1} parent=5 // pred_fallthru
        _
      %p157 = scmp.lt.s32.totalorder %s22, 2
      // Predicated region
      $region13: #{tpu_custom_call.1} parent=5 // pred_check
        %p158 = pneg %p157
      $region14: #{tpu_custom_call.1} parent=5 // pred_check_branch
        %160 = sbr.rel (%p158) target = $region16
      $region15: #{tpu_custom_call.1} parent=5 // pred_region
        // Predicated region
        $region17: #{tpu_custom_call.1} parent=15 // pred_check
          %p161 = pneg %p56
        $region18: #{tpu_custom_call.1} parent=15 // pred_check_branch
          %163 = sbr.rel (%p161) target = $region20
        $region19: #{tpu_custom_call.1} parent=15 // pred_region
          %s164 = sand.u32 %s46, 1
          %s165 = scalar_lea.sflag [#allocation3], %s164
          %s166 = sand.u32 %s46, 1
          %s167 = smul.addr %s166, 96
          %s168 = scalar_lea.vmem [#allocation2], %s167
          %s169 = smul.u32 4, %s30
          %171 = vsyncadd %s165, 0
          %s172 = smul.addr %s29, 12
          %s173 = sadd.s32 %s169, %s172
          %s174 = smul.addr %s173, 8
          %s175 = scalar_lea.hbm %s0, %s174
          %s176 = sshll.u32 %s175, 4
          %s177 = int_to_ptr.hbm [resolvable:$true] %s176
          %s178 = sshll.u32 %s168, 4
          %s179 = int_to_ptr.vmem [resolvable:$true] %s178
          %184 = dma.hbm_to_vmem [thread:$0]  %s177, 1536, %s179, %s165, 128, 128, 8
        $region20: #{tpu_custom_call.1} parent=15 // pred_fallthru
          _
        // Predicated region
        $region21: #{tpu_custom_call.1} parent=15 // pred_check
          %p185 = pneg %p84
        $region22: #{tpu_custom_call.1} parent=15 // pred_check_branch
          %187 = sbr.rel (%p185) target = $region24
        $region23: #{tpu_custom_call.1} parent=15 // pred_region
          %s188 = sand.u32 %s74, 1
          %s189 = scalar_lea.sflag [#allocation6], %s188
          %s190 = sand.u32 %s74, 1
          %s191 = smul.addr %s190, 96
          %s192 = scalar_lea.vmem [#allocation5], %s191
          %s193 = smul.u32 4, %s30
          %195 = vsyncadd %s189, 0
          %s196 = smul.addr %s29, 12
          %s197 = sadd.s32 %s193, %s196
          %s198 = smul.addr %s197, 8
          %s199 = scalar_lea.hbm %s1, %s198
          %s200 = sshll.u32 %s199, 4
          %s201 = int_to_ptr.hbm [resolvable:$true] %s200
          %s202 = sshll.u32 %s192, 4
          %s203 = int_to_ptr.vmem [resolvable:$true] %s202
          %208 = dma.hbm_to_vmem [thread:$0]  %s201, 1536, %s203, %s189, 128, 128, 8
        $region24: #{tpu_custom_call.1} parent=15 // pred_fallthru
          _
      $region16: #{tpu_custom_call.1} parent=5 // pred_fallthru
        _
      %p209 = scmp.le.s32.totalorder 1, %s22
      %p210 = scmp.lt.s32.totalorder %s22, 3
      %p211 = pnand %p209, %p210
      %p212 = pneg %p211
      // Predicated region
      $region25: #{tpu_custom_call.1} parent=5 // pred_check
        _
      $region26: #{tpu_custom_call.1} parent=5 // pred_check_branch
        %214 = sbr.rel (%p211) target = $region28
      $region27: #{tpu_custom_call.1} parent=5 // pred_region
        %s215 = ssub.s32 %s22, 1
        %s216 = sand.u32 %s49, 1
        %s217 = scalar_lea.sflag [#allocation3], %s216
        %s218 = sand.u32 %s49, 1
        %s219 = smul.addr %s218, 96
        %s220 = scalar_lea.vmem [#allocation2], %s219
        // Predicated region
        $region29: #{tpu_custom_call.1} parent=27 // pred_check
          %p221 = pneg %p62
        $region30: #{tpu_custom_call.1} parent=27 // pred_check_branch
          %223 = sbr.rel (%p221) target = $region32
        $region31: #{tpu_custom_call.1} parent=27 // pred_region
          %225 = dma.done %s217, 1536
        $region32: #{tpu_custom_call.1} parent=27 // pred_fallthru
          _
        %s226 = sand.u32 %s77, 1
        %s227 = scalar_lea.sflag [#allocation6], %s226
        %s228 = sand.u32 %s77, 1
        %s229 = smul.addr %s228, 96
        %s230 = scalar_lea.vmem [#allocation5], %s229
        // Predicated region
        $region33: #{tpu_custom_call.1} parent=27 // pred_check
          %p231 = pneg %p90
        $region34: #{tpu_custom_call.1} parent=27 // pred_check_branch
          %233 = sbr.rel (%p231) target = $region36
        $region35: #{tpu_custom_call.1} parent=27 // pred_region
          %235 = dma.done %s227, 1536
        $region36: #{tpu_custom_call.1} parent=27 // pred_fallthru
          _
        %s236 = sand.u32 %s49, 1
        %s237 = scalar_lea.sflag [#allocation3], %s236
        %s238 = sand.u32 %s49, 1
        %s239 = smul.addr %s238, 96
        %s240 = scalar_lea.vmem [#allocation2], %s239
        %p241 = pneg %p62
        %p242 = pneg %p59
        %s243 = sand.u32 %s77, 1
        %s244 = scalar_lea.sflag [#allocation6], %s243
        %s245 = sand.u32 %s77, 1
        %s246 = smul.addr %s245, 96
        %s247 = scalar_lea.vmem [#allocation5], %s246
        %p248 = pneg %p90
        %p249 = pneg %p87
        %p250 = pneg %p116
        %p251 = pneg %p113
        %s252 = sand.u32 %s103, 1
        %s253 = scalar_lea.sflag [#allocation4], %s252
        %s254 = sand.u32 %s103, 1
        %s255 = scalar_lea.vmem [#allocation7], %s254
        %p256 = pneg %p142
        %p257 = pneg %p139
        %s258 = sand.u32 %s129, 1
        %s259 = scalar_lea.sflag [#allocation9], %s258
        %s260 = sand.u32 %s129, 1
        %s261 = scalar_lea.vmem [#allocation8], %s260
        %s262 = smul.u32 4, %s32
        %s263 = smul.u32 4, %s32
        %p264 = scmp.eq.s32.totalorder %s32, 0
        // Predicated region
        $region37: #{tpu_custom_call.1} parent=27 // pred_check
          %p265 = pneg %p264
        $region38: #{tpu_custom_call.1} parent=27 // pred_check_branch
          %267 = sbr.rel (%p265) target = $region40
        $region39: #{tpu_custom_call.1} parent=27 // pred_region
          %vm268 = vcmask 16384
          %269 = vst.msk [vmem:[%s255] sm:$0x1] %vm268, 0.0
          %270 = vst.msk [vmem:[%s261] sm:$0x1] %vm268, 0.0
        $region40: #{tpu_custom_call.1} parent=27 // pred_fallthru
          _
        %v271 = vld [vmem:[%s220] sm:$0xff]
        %v272 = vld [vmem:[%s220 + $0x8] sm:$0xff]
        %v273 = vld [vmem:[%s220 + $0x10] sm:$0xff]
        %v274 = vld [vmem:[%s220 + $0x18] sm:$0xff]
        %s275 = sadd.s32 0, 32
        %s276 = scalar_lea.vmem %s220, %s275 [#allocation2]
        %v277 = vld [vmem:[%s276] sm:$0xff]
        %v278 = vld [vmem:[%s276 + $0x8] sm:$0xff]
        %v279 = vld [vmem:[%s276 + $0x10] sm:$0xff]
        %v280 = vld [vmem:[%s276 + $0x18] sm:$0xff]
        %vm281 = vcmp.gt.f32.partialorder %v277, %v271
        %vm282 = vcmp.gt.f32.partialorder %v278, %v272
        %vm283 = vcmp.gt.f32.partialorder %v279, %v273
        %vm284 = vcmp.gt.f32.partialorder %v280, %v274
        %v285 = vsel %vm281, 1, 0
        %v286 = vsel %vm282, 1, 0
        %v287 = vsel %vm283, 1, 0
        %v288 = vsel %vm284, 1, 0
        %v289 = vsel %vm281, %v277, %v271
        %v290 = vsel %vm282, %v278, %v272
        %v291 = vsel %vm283, %v279, %v273
        %v292 = vsel %vm284, %v280, %v274
        %s293 = sadd.s32 0, 64
        %s294 = scalar_lea.vmem %s220, %s293 [#allocation2]
        %v295 = vld [vmem:[%s294] sm:$0xff]
        %v296 = vld [vmem:[%s294 + $0x8] sm:$0xff]
        %v297 = vld [vmem:[%s294 + $0x10] sm:$0xff]
        %v298 = vld [vmem:[%s294 + $0x18] sm:$0xff]
        %vm299 = vcmp.gt.f32.partialorder %v295, %v289
        %vm300 = vcmp.gt.f32.partialorder %v296, %v290
        %vm301 = vcmp.gt.f32.partialorder %v297, %v291
        %vm302 = vcmp.gt.f32.partialorder %v298, %v292
        %v303 = vsel %vm299, 2, %v285
        %v304 = vsel %vm300, 2, %v286
        %v305 = vsel %vm301, 2, %v287
        %v306 = vsel %vm302, 2, %v288
        %v307 = vld [vmem:[%s230] sm:$0xff]
        %v308 = vld [vmem:[%s230 + $0x8] sm:$0xff]
        %v309 = vld [vmem:[%s230 + $0x10] sm:$0xff]
        %v310 = vld [vmem:[%s230 + $0x18] sm:$0xff]
        %vm311 = vcmp.eq.s32.totalorder %v303, 0
        %vm312 = vcmp.eq.s32.totalorder %v304, 0
        %vm313 = vcmp.eq.s32.totalorder %v305, 0
        %vm314 = vcmp.eq.s32.totalorder %v306, 0
        %v315 = vsel %vm311, %v307, 0.0
        %v316 = vsel %vm312, %v308, 0.0
        %v317 = vsel %vm313, %v309, 0.0
        %v318 = vsel %vm314, %v310, 0.0
        %v319 = vadd.f32 %v315, 0.0
        %v320 = vadd.f32 %v316, 0.0
        %v321 = vadd.f32 %v317, 0.0
        %v322 = vadd.f32 %v318, 0.0
        %v323 = vadd.f32 %v307, 1.0
        %v324 = vadd.f32 %v308, 1.0
        %v325 = vadd.f32 %v309, 1.0
        %v326 = vadd.f32 %v310, 1.0
        %v327 = vsel %vm311, %v323, %v307
        %v328 = vsel %vm312, %v324, %v308
        %v329 = vsel %vm313, %v325, %v309
        %v330 = vsel %vm314, %v326, %v310
        %v331 = vadd.f32 %v327, 0.0
        %v332 = vadd.f32 %v328, 0.0
        %v333 = vadd.f32 %v329, 0.0
        %v334 = vadd.f32 %v330, 0.0
        %s335 = scalar_lea.vmem %s230, %s275 [#allocation5]
        %v336 = vld [vmem:[%s335] sm:$0xff]
        %v337 = vld [vmem:[%s335 + $0x8] sm:$0xff]
        %v338 = vld [vmem:[%s335 + $0x10] sm:$0xff]
        %v339 = vld [vmem:[%s335 + $0x18] sm:$0xff]
        %vm340 = vcmp.eq.s32.totalorder %v303, 1
        %vm341 = vcmp.eq.s32.totalorder %v304, 1
        %vm342 = vcmp.eq.s32.totalorder %v305, 1
        %vm343 = vcmp.eq.s32.totalorder %v306, 1
        %v344 = vsel %vm340, %v336, 0.0
        %v345 = vsel %vm341, %v337, 0.0
        %v346 = vsel %vm342, %v338, 0.0
        %v347 = vsel %vm343, %v339, 0.0
        %v348 = vadd.f32 %v344, 0.0
        %v349 = vadd.f32 %v345, 0.0
        %v350 = vadd.f32 %v346, 0.0
        %v351 = vadd.f32 %v347, 0.0
        %v352 = vadd.f32 %v336, 1.0
        %v353 = vadd.f32 %v337, 1.0
        %v354 = vadd.f32 %v338, 1.0
        %v355 = vadd.f32 %v339, 1.0
        %v356 = vsel %vm340, %v352, %v336
        %v357 = vsel %vm341, %v353, %v337
        %v358 = vsel %vm342, %v354, %v338
        %v359 = vsel %vm343, %v355, %v339
        %v360 = vadd.f32 %v356, 0.0
        %v361 = vadd.f32 %v357, 0.0
        %v362 = vadd.f32 %v358, 0.0
        %v363 = vadd.f32 %v359, 0.0
        %s364 = scalar_lea.vmem %s230, %s293 [#allocation5]
        %v365 = vld [vmem:[%s364] sm:$0xff]
        %v366 = vld [vmem:[%s364 + $0x8] sm:$0xff]
        %v367 = vld [vmem:[%s364 + $0x10] sm:$0xff]
        %v368 = vld [vmem:[%s364 + $0x18] sm:$0xff]
        %vm369 = vcmp.eq.s32.totalorder %v303, 2
        %vm370 = vcmp.eq.s32.totalorder %v304, 2
        %vm371 = vcmp.eq.s32.totalorder %v305, 2
        %vm372 = vcmp.eq.s32.totalorder %v306, 2
        %v373 = vsel %vm369, %v365, 0.0
        %v374 = vsel %vm370, %v366, 0.0
        %v375 = vsel %vm371, %v367, 0.0
        %v376 = vsel %vm372, %v368, 0.0
        %v377 = vadd.f32 %v373, 0.0
        %v378 = vadd.f32 %v374, 0.0
        %v379 = vadd.f32 %v375, 0.0
        %v380 = vadd.f32 %v376, 0.0
        %v381 = vadd.f32 %v365, 1.0
        %v382 = vadd.f32 %v366, 1.0
        %v383 = vadd.f32 %v367, 1.0
        %v384 = vadd.f32 %v368, 1.0
        %v385 = vsel %vm369, %v381, %v365
        %v386 = vsel %vm370, %v382, %v366
        %v387 = vsel %vm371, %v383, %v367
        %v388 = vsel %vm372, %v384, %v368
        %v389 = vadd.f32 %v385, 0.0
        %v390 = vadd.f32 %v386, 0.0
        %v391 = vadd.f32 %v387, 0.0
        %v392 = vadd.f32 %v388, 0.0
        %v393 = vlaneseq
        %v394 = vand.u32 %v393, 127
        %395 = vadd.xlane.f32.xlu0 %v319
        %v396 = vpop.xlane.xlu0 %395
        %397 = vadd.xlane.f32.xlu0 %v320
        %v398 = vpop.xlane.xlu0 %397
        %399 = vadd.xlane.f32.xlu0 %v321
        %v400 = vpop.xlane.xlu0 %399
        %401 = vadd.xlane.f32.xlu0 %v322
        %v402 = vpop.xlane.xlu0 %401
        %v403 = vadd.f32 %v396, %v398
        %v404 = vadd.f32 %v403, %v400
        %v405 = vadd.f32 %v404, %v402
        %v406 = vrot.slane %v405, 4
        %v407 = vadd.f32 %v405, %v406
        %v408 = vrot.slane %v407, 2
        %v409 = vadd.f32 %v407, %v408
        %v410 = vrot.slane %v409, 1
        %v411 = vadd.f32 %v409, %v410
        %412 = vadd.xlane.f32.xlu0 %v331
        %v413 = vpop.xlane.xlu0 %412
        %414 = vadd.xlane.f32.xlu0 %v332
        %v415 = vpop.xlane.xlu0 %414
        %416 = vadd.xlane.f32.xlu0 %v333
        %v417 = vpop.xlane.xlu0 %416
        %418 = vadd.xlane.f32.xlu0 %v334
        %v419 = vpop.xlane.xlu0 %418
        %v420 = vadd.f32 %v413, %v415
        %v421 = vadd.f32 %v420, %v417
        %v422 = vadd.f32 %v421, %v419
        %v423 = vrot.slane %v422, 4
        %v424 = vadd.f32 %v422, %v423
        %v425 = vrot.slane %v424, 2
        %v426 = vadd.f32 %v424, %v425
        %v427 = vrot.slane %v426, 1
        %v428 = vadd.f32 %v426, %v427
        %vm429 = vcmp.eq.s32.totalorder %v394, 0
        %v430 = vsel %vm429, %v411, 0.0
        %v431 = vadd.f32 %v430, 0.0
        %v432 = vsel %vm429, %v428, 0.0
        %v433 = vadd.f32 %v432, 0.0
        %434 = vadd.xlane.f32.xlu0 %v348
        %v435 = vpop.xlane.xlu0 %434
        %436 = vadd.xlane.f32.xlu0 %v349
        %v437 = vpop.xlane.xlu0 %436
        %438 = vadd.xlane.f32.xlu0 %v350
        %v439 = vpop.xlane.xlu0 %438
        %440 = vadd.xlane.f32.xlu0 %v351
        %v441 = vpop.xlane.xlu0 %440
        %v442 = vadd.f32 %v435, %v437
        %v443 = vadd.f32 %v442, %v439
        %v444 = vadd.f32 %v443, %v441
        %v445 = vrot.slane %v444, 4
        %v446 = vadd.f32 %v444, %v445
        %v447 = vrot.slane %v446, 2
        %v448 = vadd.f32 %v446, %v447
        %v449 = vrot.slane %v448, 1
        %v450 = vadd.f32 %v448, %v449
        %451 = vadd.xlane.f32.xlu0 %v360
        %v452 = vpop.xlane.xlu0 %451
        %453 = vadd.xlane.f32.xlu0 %v361
        %v454 = vpop.xlane.xlu0 %453
        %455 = vadd.xlane.f32.xlu0 %v362
        %v456 = vpop.xlane.xlu0 %455
        %457 = vadd.xlane.f32.xlu0 %v363
        %v458 = vpop.xlane.xlu0 %457
        %v459 = vadd.f32 %v452, %v454
        %v460 = vadd.f32 %v459, %v456
        %v461 = vadd.f32 %v460, %v458
        %v462 = vrot.slane %v461, 4
        %v463 = vadd.f32 %v461, %v462
        %v464 = vrot.slane %v463, 2
        %v465 = vadd.f32 %v463, %v464
        %v466 = vrot.slane %v465, 1
        %v467 = vadd.f32 %v465, %v466
        %vm468 = vcmp.eq.s32.totalorder %v394, 1
        %v469 = vsel %vm468, %v450, 0.0
        %v470 = vadd.f32 %v431, %v469
        %v471 = vsel %vm468, %v467, 0.0
        %v472 = vadd.f32 %v433, %v471
        %473 = vadd.xlane.f32.xlu0 %v377
        %v474 = vpop.xlane.xlu0 %473
        %475 = vadd.xlane.f32.xlu0 %v378
        %v476 = vpop.xlane.xlu0 %475
        %477 = vadd.xlane.f32.xlu0 %v379
        %v478 = vpop.xlane.xlu0 %477
        %479 = vadd.xlane.f32.xlu0 %v380
        %v480 = vpop.xlane.xlu0 %479
        %v481 = vadd.f32 %v474, %v476
        %v482 = vadd.f32 %v481, %v478
        %v483 = vadd.f32 %v482, %v480
        %v484 = vrot.slane %v483, 4
        %v485 = vadd.f32 %v483, %v484
        %v486 = vrot.slane %v485, 2
        %v487 = vadd.f32 %v485, %v486
        %v488 = vrot.slane %v487, 1
        %v489 = vadd.f32 %v487, %v488
        %490 = vadd.xlane.f32.xlu0 %v389
        %v491 = vpop.xlane.xlu0 %490
        %492 = vadd.xlane.f32.xlu0 %v390
        %v493 = vpop.xlane.xlu0 %492
        %494 = vadd.xlane.f32.xlu0 %v391
        %v495 = vpop.xlane.xlu0 %494
        %496 = vadd.xlane.f32.xlu0 %v392
        %v497 = vpop.xlane.xlu0 %496
        %v498 = vadd.f32 %v491, %v493
        %v499 = vadd.f32 %v498, %v495
        %v500 = vadd.f32 %v499, %v497
        %v501 = vrot.slane %v500, 4
        %v502 = vadd.f32 %v500, %v501
        %v503 = vrot.slane %v502, 2
        %v504 = vadd.f32 %v502, %v503
        %v505 = vrot.slane %v504, 1
        %v506 = vadd.f32 %v504, %v505
        %vm507 = vcmp.eq.s32.totalorder %v394, 2
        %v508 = vsel %vm507, %v489, 0.0
        %v509 = vadd.f32 %v470, %v508
        %v510 = vsel %vm507, %v506, 0.0
        %v511 = vadd.f32 %v472, %v510
        %v512 = vld [vmem:[%s255] sm:$0x1]
        %v513 = vadd.f32 %v512, %v509
        %vm514 = vcmask 16384
        %515 = vst.msk [vmem:[%s255] sm:$0x1] %vm514, %v513
        %v516 = vld [vmem:[%s261] sm:$0x1]
        %v517 = vadd.f32 %v516, %v511
        %518 = vst.msk [vmem:[%s261] sm:$0x1] %vm514, %v517
        %s519 = sand.u32 %s103, 1
        %s520 = scalar_lea.sflag [#allocation4], %s519
        %s521 = sand.u32 %s103, 1
        %s522 = scalar_lea.vmem [#allocation7], %s521
        %s523 = sand.u32 %s129, 1
        %s524 = scalar_lea.sflag [#allocation9], %s523
        %s525 = sand.u32 %s129, 1
        %s526 = scalar_lea.vmem [#allocation8], %s525
        // Predicated region
        $region41: #{tpu_custom_call.1} parent=27 // pred_check
          %p527 = pneg %p113
        $region42: #{tpu_custom_call.1} parent=27 // pred_check_branch
          %529 = sbr.rel (%p527) target = $region44
        $region43: #{tpu_custom_call.1} parent=27 // pred_region
          %531 = vsyncadd %s520, 0
          %s532 = scalar_lea.hbm %s2, %s31
          %s534 = sshll.u32 %s522, 4
          %s535 = int_to_ptr.vmem [resolvable:$true] %s534
          %s536 = sshll.u32 %s532, 4
          %s537 = int_to_ptr.hbm [resolvable:$true] %s536
          %539 = dma.vmem_to_hbm [thread:$0]  %s535, 16, %s537, %s520
        $region44: #{tpu_custom_call.1} parent=27 // pred_fallthru
          _
        // Predicated region
        $region45: #{tpu_custom_call.1} parent=27 // pred_check
          %p540 = pneg %p139
        $region46: #{tpu_custom_call.1} parent=27 // pred_check_branch
          %542 = sbr.rel (%p540) target = $region48
        $region47: #{tpu_custom_call.1} parent=27 // pred_region
          %544 = vsyncadd %s524, 0
          %s545 = scalar_lea.hbm %s3, %s31
          %s547 = sshll.u32 %s526, 4
          %s548 = int_to_ptr.vmem [resolvable:$true] %s547
          %s549 = sshll.u32 %s545, 4
          %s550 = int_to_ptr.hbm [resolvable:$true] %s549
          %552 = dma.vmem_to_hbm [thread:$0]  %s548, 16, %s550, %s524
        $region48: #{tpu_custom_call.1} parent=27 // pred_fallthru
          _
      $region28: #{tpu_custom_call.1} parent=5 // pred_fallthru
        _
      %p553 = scmp.le.s32.totalorder 2, %s22
      // Predicated region
      $region49: #{tpu_custom_call.1} parent=5 // pred_check
        %p554 = pneg %p553
      $region50: #{tpu_custom_call.1} parent=5 // pred_check_branch
        %556 = sbr.rel (%p554) target = $region52
      $region51: #{tpu_custom_call.1} parent=5 // pred_region
        %s557 = ssub.s32 %s22, 2
        // Predicated region
        $region53: #{tpu_custom_call.1} parent=51 // pred_check
          %p558 = pneg %p119
        $region54: #{tpu_custom_call.1} parent=51 // pred_check_branch
          %560 = sbr.rel (%p558) target = $region56
        $region55: #{tpu_custom_call.1} parent=51 // pred_region
          %s561 = sand.u32 %s104, 1
          %s562 = scalar_lea.sflag [#allocation4], %s561
          %s563 = sand.u32 %s104, 1
          %s564 = scalar_lea.vmem [#allocation7], %s563
          %566 = dma.done %s562, 16
        $region56: #{tpu_custom_call.1} parent=51 // pred_fallthru
          _
        // Predicated region
        $region57: #{tpu_custom_call.1} parent=51 // pred_check
          %p567 = pneg %p145
        $region58: #{tpu_custom_call.1} parent=51 // pred_check_branch
          %569 = sbr.rel (%p567) target = $region60
        $region59: #{tpu_custom_call.1} parent=51 // pred_region
          %s570 = sand.u32 %s130, 1
          %s571 = scalar_lea.sflag [#allocation9], %s570
          %s572 = sand.u32 %s130, 1
          %s573 = scalar_lea.vmem [#allocation8], %s572
          %575 = dma.done %s571, 16
        $region60: #{tpu_custom_call.1} parent=51 // pred_fallthru
          _
      $region52: #{tpu_custom_call.1} parent=5 // pred_fallthru
        _
    $region6: #{tpu_custom_call.1} parent=1 // loop_footer
      %s26 = sadd.s32 1, %s22
    $region7: #{tpu_custom_call.1} parent=1 // loop_footer_branch
      %21 = sbr.rel target = $region3
    $region8: #{tpu_custom_call.1} parent=1 // loop_exit
      _
    %576 = vsyncpa [#allocation3], 1
    %s577 = scalar_lea.sflag [#allocation3], 1
    %578 = vsyncpa %s577, 1
    %579 = vsyncpa [#allocation6], 1
    %s580 = scalar_lea.sflag [#allocation6], 1
    %581 = vsyncpa %s580, 1
    %582 = vsyncpa [#allocation4], 1
    %s583 = scalar_lea.sflag [#allocation4], 1
    %584 = vsyncpa %s583, 1
    %585 = vsyncpa [#allocation9], 1
    %s586 = scalar_lea.sflag [#allocation9], 1
    %587 = vsyncpa %s586, 1

</llo_original>
